<compile_context>
chip_gen: v7x
topology: tpu7x:2x2x1
jax: 0.10.0
libtpu: 0.0.40
codegen_flags: <defaults>
</compile_context>

<pallas_src>
import functools

import jax
import jax.numpy as jnp
from jax.experimental import pallas as pl
from jax.experimental.pallas import tpu as pltpu


def _ceil_div(a, b):
    return -(-a // b)


@functools.lru_cache(maxsize=None)
def _tpu_defaults():
    """Returns (num_core_splits, per-input tile bytes) tuned per TPU generation."""
    splits, tile_bytes = 1, 2 * 1024 * 1024          # conservative fallback
    try:
        kind = jax.devices()[0].device_kind.lower()
    except Exception:
        return splits, tile_bytes
    if "v7" in kind or "7x" in kind:
        return 2, 4 * 1024 * 1024   # 2 TCs/chip, 32 MiB scoped VMEM per TC
    if "v6" in kind:
        return 1, 4 * 1024 * 1024   # 1 TC, 32 MiB scoped VMEM default
    if "v5" in kind and ("lite" in kind or "5e" in kind):
        return 1, 2 * 1024 * 1024   # v5e: 1 TC, 16 MiB scoped VMEM default
    if "v4" in kind or "v5" in kind:
        return 2, 2 * 1024 * 1024   # megacore chips (v4 / v5p): 2 TCs
    return splits, tile_bytes


def _content_loss_kernel(x_ref, t_ref, acc_ref, *,
                         target_mul, rows, tile_rows, blocks_per_split):
    c = pl.program_id(0)           # core split axis ("parallel")
    i = pl.program_id(1)           # reduction axis  ("arbitrary")

    @pl.when(i == 0)
    def _():
        acc_ref[...] = jnp.zeros_like(acc_ref)

    # Global row index of every sublane of this tile.  The mask covers both the
    # ragged tail of the last real block and any fully-out-of-range block whose
    # index was clamped by the index_map (its contribution becomes exactly 0).
    blk = c * blocks_per_split + i
    row0 = blk * tile_rows
    local_row = jax.lax.broadcasted_iota(jnp.int32, x_ref.shape, 0)
    valid = (row0 + local_row) < rows

    x = x_ref[...].astype(jnp.float32)
    t = t_ref[...].astype(jnp.float32)
    d = x - t * jnp.float32(target_mul)
    # Per-lane partial sums only (VPU work hidden under the HBM DMA); the
    # cross-lane reduce to a scalar happens once, outside the kernel.
    acc_ref[...] += jnp.sum(jnp.where(valid, d * d, 0.0), axis=0, keepdims=True)


def content_loss_forward(x, target, target_mul=1.0, *,
                         tile_bytes=None, num_core_splits=None):
    """ContentLoss.forward: returns (input passthrough, mse_loss(input, target*mul))."""
    assert x.shape == target.shape, "input and target must have identical shapes"
    total = int(x.size)
    itemsize = jnp.dtype(x.dtype).itemsize
    sub = {4: 8, 2: 16, 1: 32}.get(itemsize, 8)   # sublane packing per dtype width

    auto_splits, auto_tile_bytes = _tpu_defaults()
    if num_core_splits is None:
        num_core_splits = auto_splits
    if tile_bytes is None:
        tile_bytes = auto_tile_bytes

    # Lane-dense (rows, 128) view.  Reshape is a free bitcast; only when the
    # element count is not a multiple of 128 do we pad the tail (< 128 zeros,
    # which contribute (0 - mul*0)^2 == 0 to the sum).
    flat_x = x.reshape(-1)
    flat_t = target.reshape(-1)
    rem = total % 128
    if rem:
        flat_x = jnp.pad(flat_x, (0, 128 - rem))
        flat_t = jnp.pad(flat_t, (0, 128 - rem))
    rows = flat_x.size // 128
    x2 = flat_x.reshape(rows, 128)
    t2 = flat_t.reshape(rows, 128)

    # Tile rows from the per-generation byte budget (so bf16 gets 2x the rows),
    # rounded to the sublane packing and capped at the (rounded-up) row count.
    tr = max(sub, (tile_bytes // (128 * itemsize)) // sub * sub)
    tr = min(tr, _ceil_div(rows, sub) * sub)
    nblocks = _ceil_div(rows, tr)
    splits = max(1, min(int(num_core_splits), nblocks))
    bps = _ceil_div(nblocks, splits)
    last_blk = nblocks - 1

    def in_map(c, i):
        # Clamp so the DMA never targets a block outside the array; clamped
        # duplicates are masked to zero inside the kernel.
        return (jnp.minimum(c * bps + i, last_blk), 0)

    kernel = functools.partial(_content_loss_kernel,
                               target_mul=float(target_mul),
                               rows=rows, tile_rows=tr, blocks_per_split=bps)

    cost = pl.CostEstimate(
        flops=4 * total,                         # sub, scale, square, accumulate
        transcendentals=0,
        bytes_accessed=2 * total * itemsize,     # read x + read target; no y write
    )

    partials = pl.pallas_call(
        kernel,
        out_shape=jax.ShapeDtypeStruct((splits, 128), jnp.float32),
        grid_spec=pltpu.PrefetchScalarGridSpec(
            num_scalar_prefetch=0,
            grid=(splits, bps),
            in_specs=[
                pl.BlockSpec((tr, 128), in_map),   # input
                pl.BlockSpec((tr, 128), in_map),   # target
            ],
            # Same output block index across the inner axis -> resident
            # accumulator (per-core partial sum), written back once at the end.
            out_specs=pl.BlockSpec((1, 128), lambda c, i: (c, 0)),
        ),
        compiler_params=pltpu.CompilerParams(
            dimension_semantics=("parallel", "arbitrary")),
        cost_estimate=cost,
    )(x2, t2)

    loss = jnp.sum(partials) / jnp.float32(total)

    # ContentLoss.forward returns its input unchanged; the result is
    # bit-identical to x, so no kernel writeback / extra HBM copy is needed.
    return x, loss


if __name__ == "__main__":
    key = jax.random.PRNGKey(0)

    # Small NCHW-style shapes consistent with a VGG feature map.
    cases = [
        ((2, 4, 16, 16), 1.5),   # element count multiple of 128 (copy-free path)
        ((2, 3, 16, 16), 0.5),   # ragged number of (tr,128) tiles -> in-kernel mask
        ((3, 5, 7), 2.0),        # element count not multiple of 128 -> tiny tail pad
    ]
    for idx, (shape, mul) in enumerate(cases):
        kx, kt = jax.random.split(jax.random.fold_in(key, idx))
        xx = jax.random.normal(kx, shape, dtype=jnp.float32)
        tt = jax.random.normal(kt, shape, dtype=jnp.float32)

        y, loss = content_loss_forward(xx, tt, mul)
        y, loss = jax.block_until_ready((y, loss))

        ref_loss = jnp.mean((xx - tt * mul) ** 2)
        assert jnp.allclose(y, xx), "pass-through output mismatch"
        assert jnp.allclose(loss, ref_loss, rtol=1e-5, atol=1e-6), (shape, loss, ref_loss)

    print("KERNEL_OK")
</pallas_src>

<mosaic_0001>
module attributes {stable_mosaic.version = 11 : i64} {
  func.func @_content_loss_kernel(%arg0: i32, %arg1: i32, %arg2: memref<16x128xf32, #tpu.memory_space<vmem>>, %arg3: memref<16x128xf32, #tpu.memory_space<vmem>>, %arg4: memref<1x128xf32, #tpu.memory_space<vmem>>) attributes {dimension_semantics = [#tpu.dimension_semantics<parallel>, #tpu.dimension_semantics<arbitrary>], iteration_bounds = array<i64: 1, 1>, scalar_prefetch = 0 : i64, scratch_operands = 0 : i64, tpu.core_type = #tpu.core_type<tc>, window_params = [{transform_indices = @transform_0, window_bounds = array<i64: 16, 128>}, {transform_indices = @transform_1, window_bounds = array<i64: 16, 128>}, {transform_indices = @transform_2, window_bounds = array<i64: 1, 128>}]} {
    %c0_i32 = arith.constant 0 : i32
    %0 = arith.cmpi eq, %arg1, %c0_i32 : i32
    %1 = arith.extui %0 : i1 to i32
    %c0_i32_0 = arith.constant 0 : i32
    %2 = arith.cmpi ne, %1, %c0_i32_0 : i32
    scf.if %2 {
      %cst_11 = arith.constant 0.000000e+00 : f32
      %24 = vector.broadcast %cst_11 : f32 to vector<1x128xf32>
      %c0_12 = arith.constant 0 : index
      %c0_13 = arith.constant 0 : index
      %25 = vector.load %arg4[%c0_12, %c0_13] : memref<1x128xf32, #tpu.memory_space<vmem>>, vector<1x128xf32>
      tpu.vector_store %arg4[%c0_12, %c0_13], %24 {strides = array<i32>} : memref<1x128xf32, #tpu.memory_space<vmem>>, vector<1x128xf32>,
    } else {
    }
    %c1_i32 = arith.constant 1 : i32
    %3 = arith.muli %arg0, %c1_i32 : i32
    %4 = arith.addi %3, %arg1 : i32
    %c16_i32 = arith.constant 16 : i32
    %5 = arith.muli %4, %c16_i32 : i32
    %6 = tpu.iota {dimensions = array<i32: 0>} : vector<16x128xi32>
    %7 = vector.broadcast %5 : i32 to vector<16x128xi32>
    %8 = arith.addi %7, %6 : vector<16x128xi32>
    %c16_i32_1 = arith.constant 16 : i32
    %9 = vector.broadcast %c16_i32_1 : i32 to vector<16x128xi32>
    %10 = arith.cmpi slt, %8, %9 : vector<16x128xi32>
    %c0 = arith.constant 0 : index
    %c0_2 = arith.constant 0 : index
    %11 = vector.load %arg2[%c0, %c0_2] : memref<16x128xf32, #tpu.memory_space<vmem>>, vector<16x128xf32>
    %c0_3 = arith.constant 0 : index
    %c0_4 = arith.constant 0 : index
    %12 = vector.load %arg3[%c0_3, %c0_4] : memref<16x128xf32, #tpu.memory_space<vmem>>, vector<16x128xf32>
    %cst = arith.constant 1.500000e+00 : f32
    %13 = vector.broadcast %cst : f32 to vector<16x128xf32>
    %14 = arith.mulf %12, %13 : vector<16x128xf32>
    %15 = arith.subf %11, %14 : vector<16x128xf32>
    %c0_5 = arith.constant 0 : index
    %c0_6 = arith.constant 0 : index
    %16 = vector.load %arg4[%c0_5, %c0_6] : memref<1x128xf32, #tpu.memory_space<vmem>>, vector<1x128xf32>
    %17 = arith.mulf %15, %15 : vector<16x128xf32>
    %cst_7 = arith.constant 0.000000e+00 : f32
    %18 = vector.broadcast %cst_7 : f32 to vector<16x128xf32>
    %19 = arith.select %10, %17, %18 : vector<16x128xi1>, vector<16x128xf32>
    %cst_8 = arith.constant dense<0.000000e+00> : vector<128xf32>
    %20 = vector.multi_reduction <add>, %19, %cst_8 [0] : vector<16x128xf32> to vector<128xf32>
    %21 = vector.shape_cast %20 : vector<128xf32> to vector<1x128xf32>
    %22 = arith.addf %16, %21 : vector<1x128xf32>
    %c0_9 = arith.constant 0 : index
    %c0_10 = arith.constant 0 : index
    %23 = vector.load %arg4[%c0_9, %c0_10] : memref<1x128xf32, #tpu.memory_space<vmem>>, vector<1x128xf32>
    tpu.vector_store %arg4[%c0_9, %c0_10], %22 {strides = array<i32>} : memref<1x128xf32, #tpu.memory_space<vmem>>, vector<1x128xf32>,
    return
  }
  func.func @transform_0(%arg0: i32, %arg1: i32) -> (i32, i32) {
    %c1_i32 = arith.constant 1 : i32
    %0 = arith.muli %arg0, %c1_i32 : i32
    %1 = arith.addi %0, %arg1 : i32
    %c0_i32 = arith.constant 0 : i32
    %2 = arith.minsi %1, %c0_i32 : i32
    %c0_i32_0 = arith.constant 0 : i32
    %c0_i32_1 = arith.constant 0 : i32
    return %2, %c0_i32_0 : i32, i32
  }
  func.func @transform_1(%arg0: i32, %arg1: i32) -> (i32, i32) {
    %c1_i32 = arith.constant 1 : i32
    %0 = arith.muli %arg0, %c1_i32 : i32
    %1 = arith.addi %0, %arg1 : i32
    %c0_i32 = arith.constant 0 : i32
    %2 = arith.minsi %1, %c0_i32 : i32
    %c0_i32_0 = arith.constant 0 : i32
    %c0_i32_1 = arith.constant 0 : i32
    return %2, %c0_i32_0 : i32, i32
  }
  func.func @transform_2(%arg0: i32, %arg1: i32) -> (i32, i32) {
    %c0_i32 = arith.constant 0 : i32
    %c0_i32_0 = arith.constant 0 : i32
    return %arg0, %c0_i32 : i32, i32
  }
}

</mosaic_0001>

<llo_original>
// kernel: tpu_custom_call.1
$region0: #{tpu_custom_call.1}
  #allocation0 [shape = 'u32[]', space=smem, size = 0x4, offset = 0x4, fixed_abs, tag = 'smem constant byte address 0x4 - core index']
  #allocation1 [shape = 'u32[144,128]{1,0:T(1,128)}', space=vmem, size = 0x12000, scoped, tag = 'internal scratch']
  %s0 = inlined_call_operand.hbm [shape: f32[16,128], index: 0, kind: input, shape index: {}]
  %s1 = inlined_call_operand.hbm [shape: f32[16,128], index: 1, kind: input, shape index: {}]
  %s2 = inlined_call_operand.hbm [shape: f32[1,128], index: 2, kind: output, shape index: {}]
  %s3 = sld [smem:[#allocation0]]
  $region30: #{tpu_custom_call.1} parent=0
    _
  %s5 = ssub.s32 1, %s3
  %s6 = scalar_select 0, %s5, %s3
  $region1: #{tpu_custom_call.1} parent=0
    #allocation2 [shape = 'u8[8192]{0}', space=vmem, size = 0x2000, scoped, tag = 'input window, operand 0, single buffered']
    #allocation3 [shape = 's32[1]{0}', space=sflag, size = 0x4, scoped, tag = 'scoped memory for tpu_custom_call.1']
    #allocation4 [shape = 's32[1]{0}', space=sflag, size = 0x4, scoped, tag = 'scoped memory for tpu_custom_call.1']
    #allocation5 [shape = 'u8[8192]{0}', space=vmem, size = 0x2000, scoped, tag = 'input window, operand 1, single buffered']
    #allocation6 [shape = 's32[1]{0}', space=sflag, size = 0x4, scoped, tag = 'scoped memory for tpu_custom_call.1']
    #allocation7 [shape = 'u8[512]{0}', space=vmem, size = 0x400, scoped, tag = 'output window, operand 0, single buffered']
    %7 = vsyncpa [#allocation3], 0
    %8 = vsyncpa [#allocation6], 0
    %9 = vsyncpa [#allocation4], 0
    // Predicated region
    $region2: #{tpu_custom_call.1} parent=1 // pred_check
      _
    $region3: #{tpu_custom_call.1} parent=1 // pred_check_branch
      %11 = sbr.rel (0) target = $region5
    $region4: #{tpu_custom_call.1} parent=1 // pred_region
      %s12 = sadd.s32 0, 0
      %p13 = scmp.lt.s32.totalorder %s12, 0
      %s14 = scalar_select %p13, %s12, 0
      %s15 = smul.u32 2, %s14
      %s17 = ssub.s32 256, 256
      %18 = vsyncadd [#allocation3], %s17
      %s19 = smul.addr %s15, 128
      %s20 = scalar_lea.hbm %s0, %s19
      %s21 = sshll.u32 [#allocation2], 4
      %s22 = int_to_ptr.vmem [resolvable:$true] %s21
      %27 = dma.hbm_to_vmem [thread:$0]  %s20, 256, %s22, [#allocation3], 128, 128, 8
    $region5: #{tpu_custom_call.1} parent=1 // pred_fallthru
      _
    // Predicated region
    $region6: #{tpu_custom_call.1} parent=1 // pred_check
      _
    $region7: #{tpu_custom_call.1} parent=1 // pred_check_branch
      %29 = sbr.rel (0) target = $region9
    $region8: #{tpu_custom_call.1} parent=1 // pred_region
      %s30 = sadd.s32 0, 0
      %p31 = scmp.lt.s32.totalorder %s30, 0
      %s32 = scalar_select %p31, %s30, 0
      %s33 = smul.u32 2, %s32
      %s35 = ssub.s32 256, 256
      %36 = vsyncadd [#allocation6], %s35
      %s37 = smul.addr %s33, 128
      %s38 = scalar_lea.hbm %s1, %s37
      %s39 = sshll.u32 [#allocation5], 4
      %s40 = int_to_ptr.vmem [resolvable:$true] %s39
      %45 = dma.hbm_to_vmem [thread:$0]  %s38, 256, %s40, [#allocation6], 128, 128, 8
    $region9: #{tpu_custom_call.1} parent=1 // pred_fallthru
      _
    // Predicated region
    $region10: #{tpu_custom_call.1} parent=1 // pred_check
      _
    $region11: #{tpu_custom_call.1} parent=1 // pred_check_branch
      %47 = sbr.rel (0) target = $region13
    $region12: #{tpu_custom_call.1} parent=1 // pred_region
      %48 = dma.done [#allocation3], 256
    $region13: #{tpu_custom_call.1} parent=1 // pred_fallthru
      _
    // Predicated region
    $region14: #{tpu_custom_call.1} parent=1 // pred_check
      _
    $region15: #{tpu_custom_call.1} parent=1 // pred_check_branch
      %50 = sbr.rel (0) target = $region17
    $region16: #{tpu_custom_call.1} parent=1 // pred_region
      %51 = dma.done [#allocation6], 256
    $region17: #{tpu_custom_call.1} parent=1 // pred_fallthru
      _
    %s52 = sadd.s32 0, 0
    %p53 = scmp.lt.s32.totalorder %s52, 0
    %s54 = scalar_select %p53, %s52, 0
    %s55 = smul.u32 2, %s54
    %s56 = sadd.s32 0, 0
    %p57 = scmp.lt.s32.totalorder %s56, 0
    %s58 = scalar_select %p57, %s56, 0
    %s59 = smul.u32 2, %s58
    %p60 = scmp.eq.s32.totalorder 0, 0
    // Predicated region
    $region18: #{tpu_custom_call.1} parent=1 // pred_check
      %p61 = pneg %p60
    $region19: #{tpu_custom_call.1} parent=1 // pred_check_branch
      %63 = sbr.rel (%p61) target = $region21
    $region20: #{tpu_custom_call.1} parent=1 // pred_region
      %64 = vst [vmem:[#allocation7] sm:$0x1] 0.0
    $region21: #{tpu_custom_call.1} parent=1 // pred_fallthru
      _
    %s65 = sadd.s32 0, 0
    %s66 = smul.u32 %s65, 16
    %v67 = vlaneseq
    %v68 = vshrl.u32 %v67, 7
    %v69 = vadd.s32 %v68, 8
    %v70 = vstv %s66
    %v71 = vadd.s32 %v70, %v68
    %v72 = vadd.s32 %v70, %v69
    %vm73 = vcmp.lt.s32.totalorder %v71, 16
    %vm74 = vcmp.lt.s32.totalorder %v72, 16
    %v75 = vld [vmem:[#allocation2] sm:$0xff]
    %v76 = vld [vmem:[#allocation2 + $0x8] sm:$0xff]
    %v77 = vld [vmem:[#allocation5] sm:$0xff]
    %v78 = vld [vmem:[#allocation5 + $0x8] sm:$0xff]
    %v79 = vmul.f32 %v77, 1.5
    %v80 = vmul.f32 %v78, 1.5
    %v81 = vsub.f32 %v75, %v79
    %v82 = vsub.f32 %v76, %v80
    %v83 = vld [vmem:[#allocation7] sm:$0x1]
    %v84 = vmul.f32 %v81, %v81
    %v85 = vmul.f32 %v82, %v82
    %v86 = vsel %vm73, %v84, 0.0
    %v87 = vsel %vm74, %v85, 0.0
    %v88 = vadd.f32 %v86, %v87
    %v89 = vrot.slane %v88, 4
    %v90 = vadd.f32 %v88, %v89
    %v91 = vrot.slane %v90, 2
    %v92 = vadd.f32 %v90, %v91
    %v93 = vrot.slane %v92, 1
    %v94 = vadd.f32 %v92, %v93
    %v95 = vadd.f32 %v83, %v94
    %96 = vst [vmem:[#allocation7] sm:$0x1] %v95
    // Predicated region
    $region22: #{tpu_custom_call.1} parent=1 // pred_check
      _
    $region23: #{tpu_custom_call.1} parent=1 // pred_check_branch
      %98 = sbr.rel (0) target = $region25
    $region24: #{tpu_custom_call.1} parent=1 // pred_region
      %s100 = ssub.s32 16, 16
      %101 = vsyncadd [#allocation4], %s100
      %s103 = sshll.u32 [#allocation7], 4
      %s104 = int_to_ptr.vmem [resolvable:$true] %s103
      %106 = dma.vmem_to_hbm [thread:$0]  %s104, 16, %s2, [#allocation4]
    $region25: #{tpu_custom_call.1} parent=1 // pred_fallthru
      _
    // Predicated region
    $region26: #{tpu_custom_call.1} parent=1 // pred_check
      _
    $region27: #{tpu_custom_call.1} parent=1 // pred_check_branch
      %108 = sbr.rel (0) target = $region29
    $region28: #{tpu_custom_call.1} parent=1 // pred_region
      %109 = dma.done [#allocation4], 16
    $region29: #{tpu_custom_call.1} parent=1 // pred_fallthru
      _
    %110 = vsyncpa [#allocation3], 1
    %111 = vsyncpa [#allocation6], 1
    %112 = vsyncpa [#allocation4], 1

</llo_original>
